<compile_context>
chip_gen: v7x
topology: tpu7x:2x2x1
jax: 0.10.0
libtpu: 0.0.40
codegen_flags: <defaults>
</compile_context>

<pallas_src>
import functools

import jax
import jax.numpy as jnp
from jax.experimental import pallas as pl
from jax.experimental.pallas import tpu as pltpu


# ----------------------------------------------------------------------------
# Per-generation budgets, decided once at import time from the device kind.
# ----------------------------------------------------------------------------
def _tpu_generation():
    try:
        kind = jax.devices()[0].device_kind.lower()
    except Exception:
        return 0
    for g in (7, 6, 5, 4):
        if "v%d" % g in kind:
            return g
    return 0


_GEN = _tpu_generation()
if _GEN in (4, 5, 6):
    # 128 MiB physical VMEM -> big tiles, generous scoped limit.
    _VMEM_LIMIT = 64 * 1024 * 1024
    _TR_PREF = 512           # row (sublane) tile
    _TL1_PREF = 4096         # lane tile, pass 1 (single big input stream)
    _TL2_PREF = 2048         # lane tile, pass 2 (input + output double-buffered)
    _FUSED_MAX_F32_BYTES = 8 * 1024 * 1024
else:
    # v7x has only 64 MiB VMEM per TensorCore (and unknown -> be conservative).
    _VMEM_LIMIT = 48 * 1024 * 1024
    _TR_PREF = 256
    _TL1_PREF = 2048
    _TL2_PREF = 2048
    _FUSED_MAX_F32_BYTES = 4 * 1024 * 1024


def _cdiv(a, b):
    return -(-a // b)


def _tile(total, preferred, align):
    """Tile size: full extent if it already fits, else the aligned preferred size.

    Ragged tails are handled by cdiv grids (+ lane masking in pass 1), so there
    is no "fall back to one giant block" hazard anymore.
    """
    if total <= preferred:
        return total
    return max((preferred // align) * align, align)


# ----------------------------------------------------------------------------
# Fused VMEM-resident kernel (whole array in one block, single pallas_call).
# ----------------------------------------------------------------------------
def _fused_kernel(x_ref, w_ref, gamma_ref, beta_ref, o_ref, *, hw, eps):
    xb = x_ref[...].astype(jnp.float32)                        # (N, C, HW)
    wv = w_ref[...]                                            # (N, 1, 1) f32
    inv = 1.0 / (hw * jnp.sum(wv))                             # 1 / (H*W*sum(w))

    # Weighted per-channel mean.
    s_nc = jnp.sum(xb, axis=2, keepdims=True)                  # (N, C, 1)
    mean = jnp.sum(wv * s_nc, axis=0, keepdims=True) * inv     # (1, C, 1)

    # Two-pass weighted variance: x is VMEM-resident so the second traversal is
    # free of HBM cost and matches get_var2d exactly (no E[x^2]-mean^2
    # cancellation).
    d = xb - mean
    v_nc = jnp.sum(d * d, axis=2, keepdims=True)               # (N, C, 1)
    var = jnp.sum(wv * v_nc, axis=0, keepdims=True) * inv      # (1, C, 1)

    scale = gamma_ref[...] * jax.lax.rsqrt(var + eps)          # (1, C, 1)
    o_ref[...] = (d * scale + beta_ref[...]).astype(o_ref.dtype)


# ----------------------------------------------------------------------------
# Tiled pass 1: per-row lane-dense partial sums of x and x*x.
# ----------------------------------------------------------------------------
def _partial_sums_kernel(x_ref, s_ref, ss_ref, *, tl, pw, hw, g_li, masked):
    ji = pl.program_id(2)

    @pl.when(ji == 0)
    def _():
        s_ref[...] = jnp.zeros_like(s_ref)
        ss_ref[...] = jnp.zeros_like(ss_ref)

    xb = x_ref[...].astype(jnp.float32)                        # (tr, tl)
    if masked:
        # Ragged H*W tail: zero out-of-range lanes before summing.
        jblk = pl.program_id(1) * g_li + ji
        lane = jax.lax.broadcasted_iota(jnp.int32, xb.shape, 1)
        xb = jnp.where(jblk * tl + lane < hw, xb, 0.0)

    if pw == 1:
        # Lane tile is not a multiple of 128 (tiny full-extent H*W): plain reduce.
        s = jnp.sum(xb, axis=1, keepdims=True)
        ss = jnp.sum(xb * xb, axis=1, keepdims=True)
    else:
        # Lane-dense 128-wide partials: vreg-aligned static slices, pure VPU adds
        # (no XLU cross-lane reduce, no width-1 masked stores per grid step).
        s = jnp.zeros((xb.shape[0], pw), jnp.float32)
        ss = jnp.zeros((xb.shape[0], pw), jnp.float32)
        for k in range(tl // pw):
            c = xb[:, k * pw:(k + 1) * pw]
            s = s + c
            ss = ss + c * c

    s_ref[...] += s
    ss_ref[...] += ss


# ----------------------------------------------------------------------------
# Tiled pass 2: out = x * scale + shift (per-row scale/shift vectors).
# ----------------------------------------------------------------------------
def _apply_kernel(x_ref, scale_ref, shift_ref, o_ref):
    o_ref[...] = (x_ref[...] * scale_ref[...] + shift_ref[...]).astype(o_ref.dtype)


@functools.partial(jax.jit, static_argnames=("eps", "force_tiled"))
def batch_weight_norm2d(x, w, gamma, beta, eps=1e-5, force_tiled=False):
    """Forward of _BatchWeightNorm2d_ntest (training/eval return the same value).

    x: (N, C, H, W), w: (N,), gamma/beta: (C,).
    """
    N, C, H, W = x.shape
    NC, HW = N * C, H * W
    itemsize = jnp.dtype(x.dtype).itemsize

    w32 = w.astype(jnp.float32)
    gamma32 = gamma.astype(jnp.float32)
    beta32 = beta.astype(jnp.float32)

    # ---------------- Fused VMEM-resident fast path --------------------------
    if (not force_tiled) and NC * HW * 4 <= _FUSED_MAX_F32_BYTES:
        x3d = x.reshape(N, C, HW)
        out3d = pl.pallas_call(
            functools.partial(_fused_kernel, hw=HW, eps=float(eps)),
            out_shape=jax.ShapeDtypeStruct((N, C, HW), x.dtype),
            compiler_params=pltpu.CompilerParams(vmem_limit_bytes=_VMEM_LIMIT),
        )(x3d, w32.reshape(N, 1, 1), gamma32.reshape(1, C, 1),
          beta32.reshape(1, C, 1))
        # TODO(synk): running_mean / running_var momentum updates (training-only
        # module state, not part of the returned value) are omitted.
        return out3d.reshape(N, C, H, W)

    # ---------------- Tiled two-pass path -------------------------------------
    x2d = x.reshape(NC, HW)

    sub_align = max(8, 32 // itemsize)            # dtype-aware sublane packing
    lane_mult = max(1, 4 // itemsize)             # 16/8-bit inputs: wider lane tiles
    tr = _tile(NC, _TR_PREF, sub_align)
    tl1 = _tile(HW, _TL1_PREF * lane_mult, 128)
    tl2 = _tile(HW, _TL2_PREF * lane_mult, 128)

    g_r = _cdiv(NC, tr)
    n_lane1 = _cdiv(HW, tl1)
    # Guarantee >=2 iterations on a *parallel* axis when all rows fit in one row
    # tile, so pass 1 spans both v7x TensorCores: split the lane grid 2-way
    # (outer parallel, inner arbitrary/accumulating).
    g_lo = 2 if (g_r == 1 and n_lane1 >= 2 and n_lane1 % 2 == 0) else 1
    g_li = n_lane1 // g_lo
    pw = 128 if tl1 % 128 == 0 else 1             # lane-dense partial width
    masked = (HW % tl1) != 0

    s_part, ss_part = pl.pallas_call(
        functools.partial(_partial_sums_kernel, tl=tl1, pw=pw, hw=HW,
                          g_li=g_li, masked=masked),
        out_shape=(jax.ShapeDtypeStruct((NC, g_lo * pw), jnp.float32),
                   jax.ShapeDtypeStruct((NC, g_lo * pw), jnp.float32)),
        grid_spec=pltpu.PrefetchScalarGridSpec(
            num_scalar_prefetch=0,
            grid=(g_r, g_lo, g_li),
            in_specs=[pl.BlockSpec((tr, tl1),
                                   lambda i, jo, ji: (i, jo * g_li + ji))],
            out_specs=[pl.BlockSpec((tr, pw), lambda i, jo, ji: (i, jo)),
                       pl.BlockSpec((tr, pw), lambda i, jo, ji: (i, jo))],
        ),
        compiler_params=pltpu.CompilerParams(
            dimension_semantics=("parallel", "parallel", "arbitrary"),
            vmem_limit_bytes=_VMEM_LIMIT),
    )(x2d)

    # ---- Tiny (N, C) combine in plain JAX (folds the sample weights here) ---
    row_sum = jnp.sum(s_part, axis=1)             # (NC,)
    row_ss = jnp.sum(ss_part, axis=1)             # (NC,)
    f = 1.0 / (HW * jnp.sum(w32))                 # == N / (N*H*W*sum(w))
    mean = (w32 @ row_sum.reshape(N, C)) * f      # (C,) weighted mean
    ex2 = (w32 @ row_ss.reshape(N, C)) * f        # (C,) weighted E[x^2]
    # NOTE: single-pass variance (E[x^2]-mean^2) in f32; mathematically equal to
    # the two-pass get_var2d value, with some cancellation risk for |mean|>>std.
    var = ex2 - mean * mean
    scale_c = gamma32 * jax.lax.rsqrt(var + eps)
    shift_c = beta32 - mean * scale_c
    scale_row = jnp.broadcast_to(scale_c, (N, C)).reshape(NC, 1)
    shift_row = jnp.broadcast_to(shift_c, (N, C)).reshape(NC, 1)

    # ---- Pass 2: elementwise normalize + affine (single FMA per element) ----
    g_l2 = _cdiv(HW, tl2)
    out2d = pl.pallas_call(
        _apply_kernel,
        out_shape=jax.ShapeDtypeStruct((NC, HW), x.dtype),
        grid_spec=pltpu.PrefetchScalarGridSpec(
            num_scalar_prefetch=0,
            grid=(g_r, g_l2),
            in_specs=[pl.BlockSpec((tr, tl2), lambda i, j: (i, j)),
                      pl.BlockSpec((tr, 1), lambda i, j: (i, 0)),
                      pl.BlockSpec((tr, 1), lambda i, j: (i, 0))],
            out_specs=pl.BlockSpec((tr, tl2), lambda i, j: (i, j)),
        ),
        compiler_params=pltpu.CompilerParams(
            dimension_semantics=("parallel", "parallel"),
            vmem_limit_bytes=_VMEM_LIMIT),
    )(x2d, scale_row, shift_row)

    # TODO(synk): running_mean / running_var momentum updates (training-only
    # module state, not part of the returned value) are omitted.
    return out2d.reshape(N, C, H, W)


def _reference(x, w, gamma, beta, eps=1e-5):
    """Pure-JAX port of the PyTorch forward, for verification."""
    N = x.shape[0]
    w_exd = w.reshape(N, 1, 1, 1)
    mean = jnp.mean(w_exd * x, axis=(0, 2, 3)) * N / jnp.sum(w)
    d = x - mean.reshape(1, -1, 1, 1)
    var_ = jnp.mean(d * d * w_exd, axis=(0, 2, 3)) * N / jnp.sum(w)
    return (gamma.reshape(1, -1, 1, 1) * d
            / jnp.sqrt(var_.reshape(1, -1, 1, 1) + eps)
            + beta.reshape(1, -1, 1, 1))


def _check(key, N, C, H, W, force_tiled=False):
    kx, kw = jax.random.split(key)
    x = jax.random.normal(kx, (N, C, H, W), dtype=jnp.float32)
    w = jax.random.uniform(kw, (N,), dtype=jnp.float32, minval=0.2, maxval=1.0)
    gamma = jnp.ones((C,), dtype=jnp.float32)   # reset_parameters(): weight = 1
    beta = jnp.zeros((C,), dtype=jnp.float32)   # reset_parameters(): bias = 0

    out = jax.block_until_ready(
        batch_weight_norm2d(x, w, gamma, beta, force_tiled=force_tiled))
    ref = _reference(x, w, gamma, beta)
    assert out.shape == (N, C, H, W)
    err = float(jnp.max(jnp.abs(out - ref)))
    assert err < 1e-4, f"mismatch vs reference: {err}"


if __name__ == "__main__":
    key = jax.random.PRNGKey(0)
    k1, k2, k3, k4 = jax.random.split(key, 4)

    # Primary small shape from the module spec (fused VMEM-resident path).
    _check(k1, N=2, C=4, H=16, W=16)
    # Medium shape, still on the fused path.
    _check(k2, N=40, C=8, H=48, W=48)
    # Same medium shape, forced onto the tiled two-pass path (multi-block grids,
    # lane-dense 128-wide partial accumulators).
    _check(k3, N=40, C=8, H=48, W=48, force_tiled=True)
    # Ragged shape forced onto the tiled path (full-extent blocks, pw == 1 branch).
    _check(k4, N=6, C=3, H=20, W=20, force_tiled=True)

    print("KERNEL_OK")
</pallas_src>

<mosaic_0001>
module attributes {stable_mosaic.version = 11 : i64} {
  func.func @_fused_kernel(%arg0: memref<2x4x256xf32, #tpu.memory_space<vmem>>, %arg1: memref<2x1x1xf32, #tpu.memory_space<vmem>>, %arg2: memref<1x4x1xf32, #tpu.memory_space<vmem>>, %arg3: memref<1x4x1xf32, #tpu.memory_space<vmem>>, %arg4: memref<2x4x256xf32, #tpu.memory_space<vmem>>) attributes {dimension_semantics = [], scalar_prefetch = 0 : i64, scratch_operands = 0 : i64, tpu.core_type = #tpu.core_type<tc>} {
    %c0 = arith.constant 0 : index
    %c0_0 = arith.constant 0 : index
    %c0_1 = arith.constant 0 : index
    %0 = vector.load %arg0[%c0, %c0_0, %c0_1] : memref<2x4x256xf32, #tpu.memory_space<vmem>>, vector<2x4x256xf32>
    %c0_2 = arith.constant 0 : index
    %c0_3 = arith.constant 0 : index
    %c0_4 = arith.constant 0 : index
    %1 = vector.load %arg1[%c0_2, %c0_3, %c0_4] : memref<2x1x1xf32, #tpu.memory_space<vmem>>, vector<2x1x1xf32>
    %2 = vector.shape_cast %1 : vector<2x1x1xf32> to vector<1x2x1x1xf32>
    %cst = arith.constant dense<0.000000e+00> : vector<1xf32>
    %3 = vector.multi_reduction <add>, %2, %cst [1, 2, 3] : vector<1x2x1x1xf32> to vector<1xf32>
    %4 = vector.shape_cast %3 : vector<1xf32> to vector<1x1x1x1xf32>
    %5 = vector.extract %4[0, 0, 0, 0] : f32 from vector<1x1x1x1xf32>
    %cst_5 = arith.constant 2.560000e+02 : f32
    %6 = arith.mulf %cst_5, %5 : f32
    %cst_6 = arith.constant 1.000000e+00 : f32
    %7 = arith.divf %cst_6, %6 : f32
    %cst_7 = arith.constant dense<0.000000e+00> : vector<2x4xf32>
    %8 = vector.multi_reduction <add>, %0, %cst_7 [2] : vector<2x4x256xf32> to vector<2x4xf32>
    %9 = vector.shape_cast %8 : vector<2x4xf32> to vector<2x4x1xf32>
    %10 = vector.broadcast %1 : vector<2x1x1xf32> to vector<2x4x1xf32>
    %11 = arith.mulf %10, %9 : vector<2x4x1xf32>
    %cst_8 = arith.constant dense<0.000000e+00> : vector<4x1xf32>
    %12 = vector.multi_reduction <add>, %11, %cst_8 [0] : vector<2x4x1xf32> to vector<4x1xf32>
    %13 = vector.shape_cast %12 : vector<4x1xf32> to vector<1x4x1xf32>
    %14 = vector.broadcast %7 : f32 to vector<1x4x1xf32>
    %15 = arith.mulf %13, %14 : vector<1x4x1xf32>
    %16 = vector.broadcast %15 : vector<1x4x1xf32> to vector<2x4x256xf32>
    %17 = arith.subf %0, %16 : vector<2x4x256xf32>
    %18 = arith.mulf %17, %17 : vector<2x4x256xf32>
    %cst_9 = arith.constant dense<0.000000e+00> : vector<2x4xf32>
    %19 = vector.multi_reduction <add>, %18, %cst_9 [2] : vector<2x4x256xf32> to vector<2x4xf32>
    %20 = vector.shape_cast %19 : vector<2x4xf32> to vector<2x4x1xf32>
    %21 = vector.broadcast %1 : vector<2x1x1xf32> to vector<2x4x1xf32>
    %22 = arith.mulf %21, %20 : vector<2x4x1xf32>
    %cst_10 = arith.constant dense<0.000000e+00> : vector<4x1xf32>
    %23 = vector.multi_reduction <add>, %22, %cst_10 [0] : vector<2x4x1xf32> to vector<4x1xf32>
    %24 = vector.shape_cast %23 : vector<4x1xf32> to vector<1x4x1xf32>
    %25 = vector.broadcast %7 : f32 to vector<1x4x1xf32>
    %26 = arith.mulf %24, %25 : vector<1x4x1xf32>
    %c0_11 = arith.constant 0 : index
    %c0_12 = arith.constant 0 : index
    %c0_13 = arith.constant 0 : index
    %27 = vector.load %arg2[%c0_11, %c0_12, %c0_13] : memref<1x4x1xf32, #tpu.memory_space<vmem>>, vector<1x4x1xf32>
    %cst_14 = arith.constant 9.99999974E-6 : f32
    %28 = vector.broadcast %cst_14 : f32 to vector<1x4x1xf32>
    %29 = arith.addf %26, %28 : vector<1x4x1xf32>
    %30 = math.rsqrt %29 : vector<1x4x1xf32>
    %31 = arith.mulf %27, %30 : vector<1x4x1xf32>
    %32 = vector.broadcast %31 : vector<1x4x1xf32> to vector<2x4x256xf32>
    %33 = arith.mulf %17, %32 : vector<2x4x256xf32>
    %c0_15 = arith.constant 0 : index
    %c0_16 = arith.constant 0 : index
    %c0_17 = arith.constant 0 : index
    %34 = vector.load %arg3[%c0_15, %c0_16, %c0_17] : memref<1x4x1xf32, #tpu.memory_space<vmem>>, vector<1x4x1xf32>
    %35 = vector.broadcast %34 : vector<1x4x1xf32> to vector<2x4x256xf32>
    %36 = arith.addf %33, %35 : vector<2x4x256xf32>
    %c0_18 = arith.constant 0 : index
    %c0_19 = arith.constant 0 : index
    %c0_20 = arith.constant 0 : index
    %37 = vector.load %arg4[%c0_18, %c0_19, %c0_20] : memref<2x4x256xf32, #tpu.memory_space<vmem>>, vector<2x4x256xf32>
    tpu.vector_store %arg4[%c0_18, %c0_19, %c0_20], %36 {strides = array<i32>} : memref<2x4x256xf32, #tpu.memory_space<vmem>>, vector<2x4x256xf32>,
    return
  }
}

</mosaic_0001>

<llo_original>
// kernel: batch_weight_norm2d.1
$region0: #{batch_weight_norm2d.1}
  #allocation0 [shape = 'u32[]', space=smem, size = 0x4, offset = 0x4, fixed_abs, tag = 'smem constant byte address 0x4 - core index']
  #allocation1 [shape = 'u32[144,128]{1,0:T(1,128)}', space=vmem, size = 0x12000, scoped, tag = 'internal scratch']
  %s0 = inlined_call_operand.vmem [shape: f32[2,4,256], index: 0, kind: input, shape index: {}]
  %s1 = inlined_call_operand.vmem [shape: f32[2,1,1], index: 1, kind: input, shape index: {}]
  %s2 = inlined_call_operand.vmem [shape: f32[1,4,1], index: 2, kind: input, shape index: {}]
  %s3 = inlined_call_operand.vmem [shape: f32[1,4,1], index: 3, kind: input, shape index: {}]
  %s4 = inlined_call_operand.vmem [shape: f32[2,4,256], index: 4, kind: output, shape index: {}]
  %s5 = sld [smem:[#allocation0]]
  $region26: #{batch_weight_norm2d.1} parent=0
    _
  %s7 = ssub.s32 1, %s5
  %s8 = scalar_select 0, %s7, %s5
  // Predicated region
  $region2: #{batch_weight_norm2d.1} parent=0 // pred_check
    _
  $region3: #{batch_weight_norm2d.1} parent=0 // pred_check_branch
    %10 = sbr.rel (0) target = $region5
  $region4: #{batch_weight_norm2d.1} parent=0 // pred_region
    _
  $region5: #{batch_weight_norm2d.1} parent=0 // pred_fallthru
    _
  // Predicated region
  $region6: #{batch_weight_norm2d.1} parent=0 // pred_check
    _
  $region7: #{batch_weight_norm2d.1} parent=0 // pred_check_branch
    %12 = sbr.rel (0) target = $region9
  $region8: #{batch_weight_norm2d.1} parent=0 // pred_region
    _
  $region9: #{batch_weight_norm2d.1} parent=0 // pred_fallthru
    _
  // Predicated region
  $region10: #{batch_weight_norm2d.1} parent=0 // pred_check
    _
  $region11: #{batch_weight_norm2d.1} parent=0 // pred_check_branch
    %14 = sbr.rel (0) target = $region13
  $region12: #{batch_weight_norm2d.1} parent=0 // pred_region
    _
  $region13: #{batch_weight_norm2d.1} parent=0 // pred_fallthru
    _
  // Predicated region
  $region14: #{batch_weight_norm2d.1} parent=0 // pred_check
    _
  $region15: #{batch_weight_norm2d.1} parent=0 // pred_check_branch
    %16 = sbr.rel (0) target = $region17
  $region16: #{batch_weight_norm2d.1} parent=0 // pred_region
    _
  $region17: #{batch_weight_norm2d.1} parent=0 // pred_fallthru
    _
  %v17 = vld [vmem:[%s0] sm:$0xff]
  %v18 = vld [vmem:[%s0 + $0x8] sm:$0xff]
  %v19 = vld [vmem:[%s1] sm:$0x1]
  %v20 = vld [vmem:[%s1 + $0x1] sm:$0x1]
  %vm21 = vcmask 0
  %v22 = vsel %vm21, %v19, 0.0
  %v23 = vsel %vm21, %v20, 0.0
  %v24 = vadd.f32 %v22, %v23
  %25 = vadd.xlane.f32.xlu0 %v24
  %v26 = vpop.xlane.xlu0 %25
  %v27 = vrot.slane %v26, 4
  %v28 = vadd.f32 %v26, %v27
  %v29 = vrot.slane %v28, 2
  %v30 = vadd.f32 %v28, %v29
  %v31 = vrot.slane %v30, 1
  %v32 = vadd.f32 %v30, %v31
  %s33 = vtos %v32
  %s34 = smul.f32 %s33, 256.0
  %v35 = vstv %s34
  %v36 = vrcp.pop %v35
  %s37 = vtos %v36
  %v40 = vcombine.high %v17, %v17
  %v41 = vcombine.high %v18, %v18
  %vm44 = vcmask 1043456
  %v45 = vsel %vm44, %v17, 0.0
  %v46 = vsel %vm44, %v40, 0.0
  %v47 = vadd.f32 %v45, %v46
  %48 = vadd.xlane.f32.xlu0 %v47
  %v49 = vpop.xlane.xlu0 %48
  %v50 = vsel %vm44, %v18, 0.0
  %v51 = vsel %vm44, %v41, 0.0
  %v52 = vadd.f32 %v50, %v51
  %53 = vadd.xlane.f32.xlu0 %v52
  %v54 = vpop.xlane.xlu0 %53
  %v57 = vlaneseq
  %v58 = vshrl.u32 %v57, 7
  %v59 = vsub.s32 0, %v58
  %v60 = vrot.slane %v19, %v59
  %v61 = vlaneseq
  %v62 = vshrl.u32 %v61, 7
  %v63 = vsub.s32 0, %v62
  %v64 = vrot.slane %v20, %v63
  %v67 = vmul.f32 %v60, %v49
  %v68 = vmul.f32 %v64, %v54
  %vm69 = vcmask 3072
  %v70 = vsel %vm69, %v67, 0.0
  %v71 = vsel %vm69, %v68, 0.0
  %v72 = vadd.f32 %v70, %v71
  %v73 = vstv %s37
  %v74 = vmul.f32 %v72, %v73
  %76 = vset.pattern.permute.xlu0 0
  %77 = vperm.xlu0 %76, %v74
  %v78 = vpop.permute.xlu0 %77
  %v80 = vunpack.c.l.s4 839922192
  %v81 = vunpack.c.0.s8 %v80
  %v82 = vlaneseq
  %v83 = vshrl.u32 %v82, 7
  %v84 = vsub.s32 %v81, %v83
  %v85 = vrot.slane %v78, %v84
  %v87 = vsub.f32 %v17, %v85
  %v88 = vsub.f32 %v18, %v85
  %v89 = vmul.f32 %v87, %v87
  %v90 = vmul.f32 %v88, %v88
  %v93 = vcombine.high %v89, %v89
  %v94 = vcombine.high %v90, %v90
  %v97 = vsel %vm44, %v89, 0.0
  %v98 = vsel %vm44, %v93, 0.0
  %v99 = vadd.f32 %v97, %v98
  %100 = vadd.xlane.f32.xlu0 %v99
  %v101 = vpop.xlane.xlu0 %100
  %v102 = vsel %vm44, %v90, 0.0
  %v103 = vsel %vm44, %v94, 0.0
  %v104 = vadd.f32 %v102, %v103
  %105 = vadd.xlane.f32.xlu0 %v104
  %v106 = vpop.xlane.xlu0 %105
  %v107 = vmul.f32 %v60, %v101
  %v108 = vmul.f32 %v64, %v106
  %v109 = vsel %vm69, %v107, 0.0
  %v110 = vsel %vm69, %v108, 0.0
  %v111 = vadd.f32 %v109, %v110
  %v112 = vmul.f32 %v111, %v73
  %v113 = vld [vmem:[%s2] sm:$0xf]
  %v114 = vadd.f32 %v112, 1e-05
  %v115 = vrsqrt.pop %v114
  %v116 = vmul.f32 %v113, %v115
  %118 = vset.pattern.permute.xlu0 0
  %119 = vperm.xlu0 %118, %v116
  %v120 = vpop.permute.xlu0 %119
  %v122 = vunpack.c.l.s4 839922192
  %v123 = vunpack.c.0.s8 %v122
  %v124 = vlaneseq
  %v125 = vshrl.u32 %v124, 7
  %v126 = vsub.s32 %v123, %v125
  %v127 = vrot.slane %v120, %v126
  %v129 = vmul.f32 %v87, %v127
  %v130 = vmul.f32 %v88, %v127
  %v131 = vld [vmem:[%s3] sm:$0xf]
  %133 = vset.pattern.permute.xlu0 0
  %134 = vperm.xlu0 %133, %v131
  %v135 = vpop.permute.xlu0 %134
  %v137 = vunpack.c.l.s4 839922192
  %v138 = vunpack.c.0.s8 %v137
  %v139 = vlaneseq
  %v140 = vshrl.u32 %v139, 7
  %v141 = vsub.s32 %v138, %v140
  %v142 = vrot.slane %v135, %v141
  %v144 = vadd.f32 %v129, %v142
  %v145 = vadd.f32 %v130, %v142
  %146 = vst [vmem:[%s4] sm:$0xff] %v144
  %147 = vst [vmem:[%s4 + $0x8] sm:$0xff] %v145
  // Predicated region
  $region18: #{batch_weight_norm2d.1} parent=0 // pred_check
    _
  $region19: #{batch_weight_norm2d.1} parent=0 // pred_check_branch
    %149 = sbr.rel (0) target = $region21
  $region20: #{batch_weight_norm2d.1} parent=0 // pred_region
    _
  $region21: #{batch_weight_norm2d.1} parent=0 // pred_fallthru
    _
  // Predicated region
  $region22: #{batch_weight_norm2d.1} parent=0 // pred_check
    _
  $region23: #{batch_weight_norm2d.1} parent=0 // pred_check_branch
    %151 = sbr.rel (0) target = $region25
  $region24: #{batch_weight_norm2d.1} parent=0 // pred_region
    _
  $region25: #{batch_weight_norm2d.1} parent=0 // pred_fallthru
    _

</llo_original>
